<compile_context>
chip_gen: v7x
topology: tpu7x:2x2x1
jax: 0.10.0
libtpu: 0.0.40
codegen_flags: <defaults>
</compile_context>

<pallas_src>
import jax
import jax.numpy as jnp
from jax.experimental import pallas as pl
from jax.experimental.pallas import tpu as pltpu


def _squared_relu_kernel(x_ref, o_ref):
    x = x_ref[...]
    r = jnp.maximum(x, 0)            # relu; propagates NaN like torch.relu
    o_ref[...] = (r * r).astype(o_ref.dtype)


_TILE_BYTES = 4 * 1024 * 1024        # ~4 MiB per tile (VMEM-layout bytes)
_VMEM_LIMIT = 32 * 1024 * 1024       # safe on v5e/v6e (128 MiB) and v7x (64 MiB)


def _round_up(a, m):
    return -(-a // m) * m


def squared_relu(x: jax.Array) -> jax.Array:
    """Elementwise relu(x)**2 via a tiled, pipelined Pallas TPU kernel."""
    orig_shape = x.shape
    dtype = x.dtype
    n = x.size
    if n == 0:
        return x
    itemsize = jnp.dtype(dtype).itemsize

    flat = x.reshape(-1)              # free: contiguous metadata reshape
    padded_n = n

    if n % 128 == 0:
        # Common NN-activation case: lane-dense repack, zero extra HBM traffic.
        lane = 512 if n % 512 == 0 else (256 if n % 256 == 0 else 128)
        x2 = flat.reshape(n // lane, lane)
    else:
        # Ragged: collapse leading dims, keep the original last dim.  The block
        # spans the full last dim (always a legal block shape), so no pad/slice
        # copies are needed; only the stores of the final partial lane-vreg are
        # masked, which is irrelevant at HBM-bandwidth bound.
        last = orig_shape[-1] if x.ndim >= 2 else n
        lane_padded = _round_up(last, 128)
        if 8 * lane_padded * itemsize <= _TILE_BYTES:
            x2 = flat.reshape(n // last, last)
        else:
            # Pathological ragged shape (huge indivisible last dim): fall back
            # to zero-padding.  Safe for THIS op only because relu(0)**2 == 0.
            lane = 128
            padded_n = _round_up(n, lane)
            flat = jnp.pad(flat, (0, padded_n - n))
            x2 = flat.reshape(padded_n // lane, lane)

    rows, cols = x2.shape
    cols_padded = _round_up(cols, 128)

    # Rows per tile from the byte budget (multiple of 8 sublanes).
    max_tile_r = max(8, (_TILE_BYTES // (cols_padded * itemsize)) // 8 * 8)
    if rows > max_tile_r:
        tile_r = max_tile_r
    else:
        # Aim for >= 2 grid steps so both v7x TensorCores stream and DMA
        # overlaps compute; fall back to one full block when rows is tiny.
        half = _round_up((rows + 1) // 2, 8)
        tile_r = half if half < rows else rows
    grid = (pl.cdiv(rows, tile_r),)

    out = pl.pallas_call(
        _squared_relu_kernel,
        out_shape=jax.ShapeDtypeStruct((rows, cols), dtype),
        grid_spec=pltpu.PrefetchScalarGridSpec(
            num_scalar_prefetch=0,
            grid=grid,
            in_specs=[pl.BlockSpec((tile_r, cols), lambda i: (i, 0))],
            out_specs=pl.BlockSpec((tile_r, cols), lambda i: (i, 0)),
        ),
        compiler_params=pltpu.CompilerParams(
            dimension_semantics=("parallel",),
            vmem_limit_bytes=_VMEM_LIMIT,
        ),
        cost_estimate=pl.CostEstimate(
            flops=2 * n,
            transcendentals=0,
            bytes_accessed=2 * n * itemsize,
        ),
    )(x2)

    out_flat = out.reshape(-1)
    if padded_n != n:
        out_flat = out_flat[:n]
    return out_flat.reshape(orig_shape)


if __name__ == "__main__":
    key = jax.random.PRNGKey(0)

    def ref_fn(v):
        return jnp.maximum(v, 0) ** 2

    # Primary small NCHW-style input consistent with the module's usage.
    x = jax.random.normal(key, (2, 4, 16, 16), dtype=jnp.float32)
    y = jax.block_until_ready(squared_relu(x))
    assert y.shape == x.shape and y.dtype == x.dtype
    assert jnp.allclose(y, ref_fn(x), atol=1e-6, rtol=1e-6)

    # Larger multiple-of-128 input: lane=512 repack, ~4 MiB tiles, grid >= 2.
    k1 = jax.random.PRNGKey(1)
    x1 = jax.random.normal(k1, (8, 256, 1024), dtype=jnp.float32)
    y1 = jax.block_until_ready(squared_relu(x1))
    assert jnp.allclose(y1, ref_fn(x1), atol=1e-6, rtol=1e-6)

    # Ragged input (n % 128 != 0): collapsed-2D path, no pad/slice copies.
    k2 = jax.random.PRNGKey(2)
    x2 = jax.random.normal(k2, (2, 16, 129, 130), dtype=jnp.float32)
    y2 = jax.block_until_ready(squared_relu(x2))
    assert y2.shape == x2.shape and y2.dtype == x2.dtype
    assert jnp.allclose(y2, ref_fn(x2), atol=1e-6, rtol=1e-6)

    # NaN propagation now matches torch.relu(x)**2.
    xn = x.at[0, 0, 0, 0].set(jnp.nan)
    yn = jax.block_until_ready(squared_relu(xn))
    assert bool(jnp.isnan(yn[0, 0, 0, 0]))

    print("KERNEL_OK")
</pallas_src>

<mosaic_0001>
module attributes {stable_mosaic.version = 11 : i64} {
  func.func @_squared_relu_kernel(%arg0: i32, %arg1: memref<4x512xf32, #tpu.memory_space<vmem>>, %arg2: memref<4x512xf32, #tpu.memory_space<vmem>>) attributes {dimension_semantics = [#tpu.dimension_semantics<parallel>], iteration_bounds = array<i64: 1>, scalar_prefetch = 0 : i64, scratch_operands = 0 : i64, tpu.core_type = #tpu.core_type<tc>, window_params = [{transform_indices = @transform_0, window_bounds = array<i64: 4, 512>}, {transform_indices = @transform_1, window_bounds = array<i64: 4, 512>}]} {
    %c0 = arith.constant 0 : index
    %c0_0 = arith.constant 0 : index
    %0 = vector.load %arg1[%c0, %c0_0] : memref<4x512xf32, #tpu.memory_space<vmem>>, vector<4x512xf32>
    %cst = arith.constant 0.000000e+00 : f32
    %1 = vector.broadcast %cst : f32 to vector<4x512xf32>
    %2 = arith.maximumf %0, %1 : vector<4x512xf32>
    %3 = arith.mulf %2, %2 : vector<4x512xf32>
    %c0_1 = arith.constant 0 : index
    %c0_2 = arith.constant 0 : index
    %4 = vector.load %arg2[%c0_1, %c0_2] : memref<4x512xf32, #tpu.memory_space<vmem>>, vector<4x512xf32>
    tpu.vector_store %arg2[%c0_1, %c0_2], %3 {strides = array<i32>} : memref<4x512xf32, #tpu.memory_space<vmem>>, vector<4x512xf32>,
    return
  }
  func.func @transform_0(%arg0: i32) -> (i32, i32) {
    %c0_i32 = arith.constant 0 : i32
    %c0_i32_0 = arith.constant 0 : i32
    return %arg0, %c0_i32 : i32, i32
  }
  func.func @transform_1(%arg0: i32) -> (i32, i32) {
    %c0_i32 = arith.constant 0 : i32
    %c0_i32_0 = arith.constant 0 : i32
    return %arg0, %c0_i32 : i32, i32
  }
}

</mosaic_0001>

<llo_original>
// kernel: tpu_custom_call.1
$region0: #{tpu_custom_call.1}
  #allocation0 [shape = 'u32[]', space=smem, size = 0x4, offset = 0x4, fixed_abs, tag = 'smem constant byte address 0x4 - core index']
  #allocation1 [shape = 'u32[144,128]{1,0:T(1,128)}', space=vmem, size = 0x12000, scoped, tag = 'internal scratch']
  %s0 = inlined_call_operand.hbm [shape: f32[4,512], index: 0, kind: input, shape index: {}]
  %s1 = inlined_call_operand.hbm [shape: f32[4,512], index: 1, kind: output, shape index: {}]
  %s2 = sld [smem:[#allocation0]]
  $region18: #{tpu_custom_call.1} parent=0
    _
  %s4 = ssub.s32 1, %s2
  %s5 = scalar_select 0, %s4, %s2
  $region1: #{tpu_custom_call.1} parent=0
    #allocation2 [shape = 'u8[8192]{0}', space=vmem, size = 0x2000, scoped, tag = 'input window, operand 0, single buffered']
    #allocation3 [shape = 's32[1]{0}', space=sflag, size = 0x4, scoped, tag = 'scoped memory for tpu_custom_call.1']
    #allocation4 [shape = 's32[1]{0}', space=sflag, size = 0x4, scoped, tag = 'scoped memory for tpu_custom_call.1']
    #allocation5 [shape = 'u8[8192]{0}', space=vmem, size = 0x2000, scoped, tag = 'output window, operand 0, single buffered']
    %6 = vsyncpa [#allocation3], 0
    %7 = vsyncpa [#allocation4], 0
    // Predicated region
    $region2: #{tpu_custom_call.1} parent=1 // pred_check
      _
    $region3: #{tpu_custom_call.1} parent=1 // pred_check_branch
      %9 = sbr.rel (0) target = $region5
    $region4: #{tpu_custom_call.1} parent=1 // pred_region
      %s11 = ssub.s32 256, 256
      %12 = vsyncadd [#allocation3], %s11
      %s14 = sshll.u32 [#allocation2], 4
      %s15 = int_to_ptr.vmem [resolvable:$true] %s14
      %17 = dma.hbm_to_vmem [thread:$0]  %s0, 256, %s15, [#allocation3]
    $region5: #{tpu_custom_call.1} parent=1 // pred_fallthru
      _
    // Predicated region
    $region6: #{tpu_custom_call.1} parent=1 // pred_check
      _
    $region7: #{tpu_custom_call.1} parent=1 // pred_check_branch
      %19 = sbr.rel (0) target = $region9
    $region8: #{tpu_custom_call.1} parent=1 // pred_region
      %20 = dma.done [#allocation3], 256
    $region9: #{tpu_custom_call.1} parent=1 // pred_fallthru
      _
    %v21 = vld [vmem:[#allocation2] sm:$0xff]
    %v22 = vld [vmem:[#allocation2 + $0x8] sm:$0xff]
    %v23 = vmax.f32 %v21, 0.0
    %v24 = vmax.f32 %v22, 0.0
    %v25 = vmul.f32 %v23, %v23
    %v26 = vmul.f32 %v24, %v24
    %27 = vst [vmem:[#allocation5] sm:$0xff] %v25
    %28 = vst [vmem:[#allocation5 + $0x8] sm:$0xff] %v26
    // Predicated region
    $region10: #{tpu_custom_call.1} parent=1 // pred_check
      _
    $region11: #{tpu_custom_call.1} parent=1 // pred_check_branch
      %30 = sbr.rel (0) target = $region13
    $region12: #{tpu_custom_call.1} parent=1 // pred_region
      %s32 = ssub.s32 256, 256
      %33 = vsyncadd [#allocation4], %s32
      %s35 = sshll.u32 [#allocation5], 4
      %s36 = int_to_ptr.vmem [resolvable:$true] %s35
      %38 = dma.vmem_to_hbm [thread:$0]  %s36, 256, %s1, [#allocation4]
    $region13: #{tpu_custom_call.1} parent=1 // pred_fallthru
      _
    // Predicated region
    $region14: #{tpu_custom_call.1} parent=1 // pred_check
      _
    $region15: #{tpu_custom_call.1} parent=1 // pred_check_branch
      %40 = sbr.rel (0) target = $region17
    $region16: #{tpu_custom_call.1} parent=1 // pred_region
      %41 = dma.done [#allocation4], 256
    $region17: #{tpu_custom_call.1} parent=1 // pred_fallthru
      _
    %42 = vsyncpa [#allocation3], 1
    %43 = vsyncpa [#allocation4], 1

</llo_original>
